<compile_context>
chip_gen: v6e
topology: v6e:2x2x1
jax: 0.10.0
libtpu: 0.0.40
codegen_flags: <defaults>
</compile_context>

<pallas_src>
import functools

import jax
import jax.numpy as jnp
from jax.experimental import pallas as pl
from jax.experimental.pallas import tpu as pltpu

IN_FEATURES = 4
HIDDEN = 100
OUT_FEATURES = 3
PRIOR_SIGMA = 0.1

IN_PAD = 8                 # 4 features + 1 ones-row (layer-1 bias) + zero pad, sublane-aligned
HIDDEN_PAD = 128           # hidden padded to a full lane tile
OUT_PAD = 8                # 3 outputs padded to a sublane tile
AUX = HIDDEN_PAD - 1       # spare hidden unit forced to 1.0; carries the layer-2 bias

assert IN_FEATURES + 1 <= IN_PAD
assert HIDDEN < AUX
assert OUT_FEATURES <= OUT_PAD


def _round_up(n, m):
    return (n + m - 1) // m * m


def bayesian_net_kernel(xT_ref, p1_ref, p2_ref, o_ref):
    # Reparameterization sampling: W = mu + sigma * eps   (sigma precomputed).
    w1 = p1_ref[0] + p1_ref[1] * p1_ref[2]   # [HIDDEN_PAD, IN_PAD]  (col IN_FEATURES = b1)
    w2 = p2_ref[0] + p2_ref[1] * p2_ref[2]   # [OUT_PAD, HIDDEN_PAD] (col AUX = b2)

    xT = xT_ref[...]                         # [IN_PAD, TILE_B], row IN_FEATURES == 1.0

    # Layer 1: K = IN+1 = 5 contraction as broadcast FMAs on the VPU.
    # Columns 5..7 of w1 / rows 5..7 of xT are exact zeros and are skipped.
    h = w1[:, 0:1] * xT[0:1, :]
    for k in range(1, IN_FEATURES + 1):
        h = h + w1[:, k:k + 1] * xT[k:k + 1, :]
    h = jnp.maximum(h, 0.0)                  # [HIDDEN_PAD, TILE_B]; row AUX stays 1.0

    # Layer 2: K = 128 contraction on the MXU (bias rides on column AUX of w2).
    z = jnp.dot(w2, h, preferred_element_type=jnp.float32)   # [OUT_PAD, TILE_B]
    o_ref[...] = z.astype(o_ref.dtype)


@functools.partial(jax.jit, static_argnames=("tile_b",))
def bayesian_net_forward(x, p1, p2, *, tile_b=2048):
    """x: [B, IN_FEATURES] f32 -> [B, OUT_FEATURES] f32."""
    b = x.shape[0]
    # Batch tile: lane-aligned (multiple of 128); cap keeps double-buffered
    # x/out tiles + resident weights well under v7x's 64 MiB VMEM.
    tile = min(tile_b, _round_up(b, 128))
    b_pad = _round_up(b, tile)
    grid = (b_pad // tile,)

    # Batch on lanes: [IN_PAD, B_pad]; row IN_FEATURES is all ones (layer-1 bias).
    xT = jnp.zeros((IN_PAD, b_pad), jnp.float32)
    xT = xT.at[:IN_FEATURES, :b].set(x.T.astype(jnp.float32))
    xT = xT.at[IN_FEATURES, :].set(1.0)

    flops = 2 * b_pad * (IN_PAD * HIDDEN_PAD + HIDDEN_PAD * OUT_PAD)
    bytes_accessed = 4 * (xT.size + p1.size + p2.size + OUT_PAD * b_pad)

    out = pl.pallas_call(
        bayesian_net_kernel,
        out_shape=jax.ShapeDtypeStruct((OUT_PAD, b_pad), jnp.float32),
        grid=grid,
        in_specs=[
            pl.BlockSpec((IN_PAD, tile), lambda i: (0, i)),
            pl.BlockSpec((3, HIDDEN_PAD, IN_PAD), lambda i: (0, 0, 0)),    # VMEM-resident
            pl.BlockSpec((3, OUT_PAD, HIDDEN_PAD), lambda i: (0, 0, 0)),   # VMEM-resident
        ],
        out_specs=pl.BlockSpec((OUT_PAD, tile), lambda i: (0, i)),
        compiler_params=pltpu.CompilerParams(
            dimension_semantics=("parallel",)),   # v7x: shard batch over both TCs
        cost_estimate=pl.CostEstimate(
            flops=flops, transcendentals=0, bytes_accessed=bytes_accessed),
    )(xT, p1, p2)

    # Strip padding and return batch-major output.
    return out[:OUT_FEATURES, :b].T


def init_params(key):
    """torchbnn-style init: mu ~ U(-stdv, stdv) with stdv = 1/sqrt(in_features),
    sigma = prior_sigma (= exp(log prior_sigma)), eps ~ N(0, 1).
    Returns the raw parameters (for the pure-JAX reference) and the two packed
    (mu, sigma, eps) stacks consumed by the kernel."""
    ks = jax.random.split(key, 8)
    stdv1 = 1.0 / IN_FEATURES ** 0.5
    stdv2 = 1.0 / HIDDEN ** 0.5
    sigma = jnp.float32(PRIOR_SIGMA)

    raw = {
        "w1_mu": jax.random.uniform(ks[0], (HIDDEN, IN_FEATURES), jnp.float32, -stdv1, stdv1),
        "w1_eps": jax.random.normal(ks[1], (HIDDEN, IN_FEATURES), jnp.float32),
        "b1_mu": jax.random.uniform(ks[2], (HIDDEN,), jnp.float32, -stdv1, stdv1),
        "b1_eps": jax.random.normal(ks[3], (HIDDEN,), jnp.float32),
        "w2_mu": jax.random.uniform(ks[4], (OUT_FEATURES, HIDDEN), jnp.float32, -stdv2, stdv2),
        "w2_eps": jax.random.normal(ks[5], (OUT_FEATURES, HIDDEN), jnp.float32),
        "b2_mu": jax.random.uniform(ks[6], (OUT_FEATURES,), jnp.float32, -stdv2, stdv2),
        "b2_eps": jax.random.normal(ks[7], (OUT_FEATURES,), jnp.float32),
    }

    # Layer-1 stack [3, HIDDEN_PAD, IN_PAD]: cols 0..IN-1 = W1, col IN = b1.
    # Hidden row AUX outputs a constant 1.0 (ReLU(1) = 1) to carry the layer-2
    # bias; all other padding is exact zero so padded hidden units are 0.
    p1 = jnp.zeros((3, HIDDEN_PAD, IN_PAD), jnp.float32)
    p1 = p1.at[0, :HIDDEN, :IN_FEATURES].set(raw["w1_mu"])
    p1 = p1.at[1, :HIDDEN, :IN_FEATURES].set(sigma)
    p1 = p1.at[2, :HIDDEN, :IN_FEATURES].set(raw["w1_eps"])
    p1 = p1.at[0, :HIDDEN, IN_FEATURES].set(raw["b1_mu"])
    p1 = p1.at[1, :HIDDEN, IN_FEATURES].set(sigma)
    p1 = p1.at[2, :HIDDEN, IN_FEATURES].set(raw["b1_eps"])
    p1 = p1.at[0, AUX, IN_FEATURES].set(1.0)          # constant-1 hidden unit

    # Layer-2 stack [3, OUT_PAD, HIDDEN_PAD]: cols 0..HIDDEN-1 = W2, col AUX = b2.
    p2 = jnp.zeros((3, OUT_PAD, HIDDEN_PAD), jnp.float32)
    p2 = p2.at[0, :OUT_FEATURES, :HIDDEN].set(raw["w2_mu"])
    p2 = p2.at[1, :OUT_FEATURES, :HIDDEN].set(sigma)
    p2 = p2.at[2, :OUT_FEATURES, :HIDDEN].set(raw["w2_eps"])
    p2 = p2.at[0, :OUT_FEATURES, AUX].set(raw["b2_mu"])
    p2 = p2.at[1, :OUT_FEATURES, AUX].set(sigma)
    p2 = p2.at[2, :OUT_FEATURES, AUX].set(raw["b2_eps"])

    return raw, p1, p2


def reference_forward(x, raw):
    """Pure-JAX reference of the same forward (correctness check)."""
    s = PRIOR_SIGMA
    w1 = raw["w1_mu"] + s * raw["w1_eps"]
    b1 = raw["b1_mu"] + s * raw["b1_eps"]
    w2 = raw["w2_mu"] + s * raw["w2_eps"]
    b2 = raw["b2_mu"] + s * raw["b2_eps"]
    h = jnp.maximum(x @ w1.T + b1, 0.0)
    return h @ w2.T + b2


if __name__ == "__main__":
    key = jax.random.PRNGKey(0)
    k_x, k_p = jax.random.split(key)

    batch = 8
    x = jax.random.normal(k_x, (batch, IN_FEATURES), jnp.float32)
    raw, p1, p2 = init_params(k_p)

    out = bayesian_net_forward(x, p1, p2)
    out = jax.block_until_ready(out)

    ref = reference_forward(x, raw)
    assert out.shape == (batch, OUT_FEATURES)
    assert jnp.allclose(out, ref, atol=1e-4, rtol=1e-4)

    print("KERNEL_OK")
</pallas_src>

<mosaic_0001>
module attributes {stable_mosaic.version = 11 : i64} {
  func.func @bayesian_net_kernel(%arg0: i32, %arg1: memref<8x128xf32, #tpu.memory_space<vmem>>, %arg2: memref<3x128x8xf32, #tpu.memory_space<vmem>>, %arg3: memref<3x8x128xf32, #tpu.memory_space<vmem>>, %arg4: memref<8x128xf32, #tpu.memory_space<vmem>>) attributes {dimension_semantics = [#tpu.dimension_semantics<parallel>], iteration_bounds = array<i64: 1>, scalar_prefetch = 0 : i64, scratch_operands = 0 : i64, tpu.core_type = #tpu.core_type<tc>, window_params = [{transform_indices = @transform_0, window_bounds = array<i64: 8, 128>}, {pipeline_mode = #tpu.pipeline_mode<synchronous>, transform_indices = @transform_1, window_bounds = array<i64: 3, 128, 8>}, {pipeline_mode = #tpu.pipeline_mode<synchronous>, transform_indices = @transform_2, window_bounds = array<i64: 3, 8, 128>}, {transform_indices = @transform_3, window_bounds = array<i64: 8, 128>}]} {
    %c0 = arith.constant 0 : index
    %c0_0 = arith.constant 0 : index
    %c0_1 = arith.constant 0 : index
    %0 = vector.load %arg2[%c0, %c0_0, %c0_1] : memref<3x128x8xf32, #tpu.memory_space<vmem>>, vector<1x128x8xf32>
    %1 = vector.shape_cast %0 : vector<1x128x8xf32> to vector<128x8xf32>
    %c1 = arith.constant 1 : index
    %c0_2 = arith.constant 0 : index
    %c0_3 = arith.constant 0 : index
    %2 = vector.load %arg2[%c1, %c0_2, %c0_3] : memref<3x128x8xf32, #tpu.memory_space<vmem>>, vector<1x128x8xf32>
    %3 = vector.shape_cast %2 : vector<1x128x8xf32> to vector<128x8xf32>
    %c2 = arith.constant 2 : index
    %c0_4 = arith.constant 0 : index
    %c0_5 = arith.constant 0 : index
    %4 = vector.load %arg2[%c2, %c0_4, %c0_5] : memref<3x128x8xf32, #tpu.memory_space<vmem>>, vector<1x128x8xf32>
    %5 = vector.shape_cast %4 : vector<1x128x8xf32> to vector<128x8xf32>
    %6 = arith.mulf %3, %5 : vector<128x8xf32>
    %7 = arith.addf %1, %6 : vector<128x8xf32>
    %c0_6 = arith.constant 0 : index
    %c0_7 = arith.constant 0 : index
    %c0_8 = arith.constant 0 : index
    %8 = vector.load %arg3[%c0_6, %c0_7, %c0_8] : memref<3x8x128xf32, #tpu.memory_space<vmem>>, vector<1x8x128xf32>
    %9 = vector.shape_cast %8 : vector<1x8x128xf32> to vector<8x128xf32>
    %c1_9 = arith.constant 1 : index
    %c0_10 = arith.constant 0 : index
    %c0_11 = arith.constant 0 : index
    %10 = vector.load %arg3[%c1_9, %c0_10, %c0_11] : memref<3x8x128xf32, #tpu.memory_space<vmem>>, vector<1x8x128xf32>
    %11 = vector.shape_cast %10 : vector<1x8x128xf32> to vector<8x128xf32>
    %c2_12 = arith.constant 2 : index
    %c0_13 = arith.constant 0 : index
    %c0_14 = arith.constant 0 : index
    %12 = vector.load %arg3[%c2_12, %c0_13, %c0_14] : memref<3x8x128xf32, #tpu.memory_space<vmem>>, vector<1x8x128xf32>
    %13 = vector.shape_cast %12 : vector<1x8x128xf32> to vector<8x128xf32>
    %14 = arith.mulf %11, %13 : vector<8x128xf32>
    %15 = arith.addf %9, %14 : vector<8x128xf32>
    %c0_15 = arith.constant 0 : index
    %c0_16 = arith.constant 0 : index
    %16 = vector.load %arg1[%c0_15, %c0_16] : memref<8x128xf32, #tpu.memory_space<vmem>>, vector<8x128xf32>
    %17 = vector.extract_strided_slice %7 {offsets = [0, 0], sizes = [128, 1], strides = [1, 1]} : vector<128x8xf32> to vector<128x1xf32>
    %18 = vector.extract_strided_slice %16 {offsets = [0, 0], sizes = [1, 128], strides = [1, 1]} : vector<8x128xf32> to vector<1x128xf32>
    %19 = vector.broadcast %17 : vector<128x1xf32> to vector<128x128xf32>
    %20 = vector.broadcast %18 : vector<1x128xf32> to vector<128x128xf32>
    %21 = arith.mulf %19, %20 : vector<128x128xf32>
    %22 = vector.extract_strided_slice %7 {offsets = [0, 1], sizes = [128, 1], strides = [1, 1]} : vector<128x8xf32> to vector<128x1xf32>
    %23 = vector.extract_strided_slice %16 {offsets = [1, 0], sizes = [1, 128], strides = [1, 1]} : vector<8x128xf32> to vector<1x128xf32>
    %24 = vector.broadcast %22 : vector<128x1xf32> to vector<128x128xf32>
    %25 = vector.broadcast %23 : vector<1x128xf32> to vector<128x128xf32>
    %26 = arith.mulf %24, %25 : vector<128x128xf32>
    %27 = arith.addf %21, %26 : vector<128x128xf32>
    %28 = vector.extract_strided_slice %7 {offsets = [0, 2], sizes = [128, 1], strides = [1, 1]} : vector<128x8xf32> to vector<128x1xf32>
    %29 = vector.extract_strided_slice %16 {offsets = [2, 0], sizes = [1, 128], strides = [1, 1]} : vector<8x128xf32> to vector<1x128xf32>
    %30 = vector.broadcast %28 : vector<128x1xf32> to vector<128x128xf32>
    %31 = vector.broadcast %29 : vector<1x128xf32> to vector<128x128xf32>
    %32 = arith.mulf %30, %31 : vector<128x128xf32>
    %33 = arith.addf %27, %32 : vector<128x128xf32>
    %34 = vector.extract_strided_slice %7 {offsets = [0, 3], sizes = [128, 1], strides = [1, 1]} : vector<128x8xf32> to vector<128x1xf32>
    %35 = vector.extract_strided_slice %16 {offsets = [3, 0], sizes = [1, 128], strides = [1, 1]} : vector<8x128xf32> to vector<1x128xf32>
    %36 = vector.broadcast %34 : vector<128x1xf32> to vector<128x128xf32>
    %37 = vector.broadcast %35 : vector<1x128xf32> to vector<128x128xf32>
    %38 = arith.mulf %36, %37 : vector<128x128xf32>
    %39 = arith.addf %33, %38 : vector<128x128xf32>
    %40 = vector.extract_strided_slice %7 {offsets = [0, 4], sizes = [128, 1], strides = [1, 1]} : vector<128x8xf32> to vector<128x1xf32>
    %41 = vector.extract_strided_slice %16 {offsets = [4, 0], sizes = [1, 128], strides = [1, 1]} : vector<8x128xf32> to vector<1x128xf32>
    %42 = vector.broadcast %40 : vector<128x1xf32> to vector<128x128xf32>
    %43 = vector.broadcast %41 : vector<1x128xf32> to vector<128x128xf32>
    %44 = arith.mulf %42, %43 : vector<128x128xf32>
    %45 = arith.addf %39, %44 : vector<128x128xf32>
    %cst = arith.constant 0.000000e+00 : f32
    %46 = vector.broadcast %cst : f32 to vector<128x128xf32>
    %47 = arith.maximumf %45, %46 : vector<128x128xf32>
    %cst_17 = arith.constant dense<0.000000e+00> : vector<8x128xf32>
    %48 = tpu.matmul %15, %47, %cst_17 {dimension_numbers = #tpu.dot_dimension_numbers<[1], [0], [0], [1], [0, 0, 1, 1], [], []>} : vector<8x128xf32>, vector<128x128xf32>, vector<8x128xf32> -> vector<8x128xf32>
    %c0_18 = arith.constant 0 : index
    %c0_19 = arith.constant 0 : index
    %49 = vector.load %arg4[%c0_18, %c0_19] : memref<8x128xf32, #tpu.memory_space<vmem>>, vector<8x128xf32>
    tpu.vector_store %arg4[%c0_18, %c0_19], %48 {strides = array<i32>} : memref<8x128xf32, #tpu.memory_space<vmem>>, vector<8x128xf32>,
    return
  }
  func.func @transform_0(%arg0: i32) -> (i32, i32) {
    %c0_i32 = arith.constant 0 : i32
    %c0_i32_0 = arith.constant 0 : i32
    return %c0_i32, %arg0 : i32, i32
  }
  func.func @transform_1(%arg0: i32) -> (i32, i32, i32) {
    %c0_i32 = arith.constant 0 : i32
    %c0_i32_0 = arith.constant 0 : i32
    %c0_i32_1 = arith.constant 0 : i32
    %c0_i32_2 = arith.constant 0 : i32
    return %c0_i32, %c0_i32_0, %c0_i32_1 : i32, i32, i32
  }
  func.func @transform_2(%arg0: i32) -> (i32, i32, i32) {
    %c0_i32 = arith.constant 0 : i32
    %c0_i32_0 = arith.constant 0 : i32
    %c0_i32_1 = arith.constant 0 : i32
    %c0_i32_2 = arith.constant 0 : i32
    return %c0_i32, %c0_i32_0, %c0_i32_1 : i32, i32, i32
  }
  func.func @transform_3(%arg0: i32) -> (i32, i32) {
    %c0_i32 = arith.constant 0 : i32
    %c0_i32_0 = arith.constant 0 : i32
    return %c0_i32, %arg0 : i32, i32
  }
}

</mosaic_0001>

<llo_original>
// kernel: bayesian_net_forward.1
$region0: #{bayesian_net_forward.1}
  #allocation0 [shape = 'u32[]', space=smem, size = 0x4, offset = 0x4, fixed_abs, tag = 'smem constant byte address 0x4 - core index']
  #allocation1 [shape = 'u32[144,128]{1,0:T(1,128)}', space=vmem, size = 0x12000, scoped, tag = 'internal scratch']
  %s0 = inlined_call_operand.vmem [shape: f32[8,128], index: 0, kind: input, shape index: {}]
  %s1 = inlined_call_operand.vmem [shape: f32[3,128,8], index: 1, kind: input, shape index: {}]
  %s2 = inlined_call_operand.vmem [shape: f32[3,8,128], index: 2, kind: input, shape index: {}]
  %s3 = inlined_call_operand.vmem [shape: f32[8,128], index: 3, kind: output, shape index: {}]
  %s4 = sld [smem:[#allocation0]]
  $region22: #{bayesian_net_forward.1} parent=0
    _
  %s6 = ssub.s32 1, %s4
  %s7 = scalar_select 0, %s6, %s4
  // Predicated region
  $region2: #{bayesian_net_forward.1} parent=0 // pred_check
    _
  $region3: #{bayesian_net_forward.1} parent=0 // pred_check_branch
    %9 = sbr.rel (0) target = $region5
  $region4: #{bayesian_net_forward.1} parent=0 // pred_region
    _
  $region5: #{bayesian_net_forward.1} parent=0 // pred_fallthru
    _
  // Predicated region
  $region6: #{bayesian_net_forward.1} parent=0 // pred_check
    _
  $region7: #{bayesian_net_forward.1} parent=0 // pred_check_branch
    %11 = sbr.rel (0) target = $region9
  $region8: #{bayesian_net_forward.1} parent=0 // pred_region
    _
  $region9: #{bayesian_net_forward.1} parent=0 // pred_fallthru
    _
  // Predicated region
  $region10: #{bayesian_net_forward.1} parent=0 // pred_check
    _
  $region11: #{bayesian_net_forward.1} parent=0 // pred_check_branch
    %13 = sbr.rel (0) target = $region13
  $region12: #{bayesian_net_forward.1} parent=0 // pred_region
    _
  $region13: #{bayesian_net_forward.1} parent=0 // pred_fallthru
    _
  %v14 = vld [vmem:[%s1] sm:$0xff]
  %v15 = vld [vmem:[%s1 + $0x8] sm:$0xff]
  %v16 = vld [vmem:[%s1 + $0x10] sm:$0xff]
  %v17 = vld [vmem:[%s1 + $0x18] sm:$0xff]
  %v18 = vld [vmem:[%s1 + $0x20] sm:$0xff]
  %v19 = vld [vmem:[%s1 + $0x28] sm:$0xff]
  %v20 = vld [vmem:[%s1 + $0x30] sm:$0xff]
  %v21 = vld [vmem:[%s1 + $0x38] sm:$0xff]
  %v22 = vld [vmem:[%s1 + $0x40] sm:$0xff]
  %v23 = vld [vmem:[%s1 + $0x48] sm:$0xff]
  %v24 = vld [vmem:[%s1 + $0x50] sm:$0xff]
  %v25 = vld [vmem:[%s1 + $0x58] sm:$0xff]
  %v26 = vld [vmem:[%s1 + $0x60] sm:$0xff]
  %v27 = vld [vmem:[%s1 + $0x68] sm:$0xff]
  %v28 = vld [vmem:[%s1 + $0x70] sm:$0xff]
  %v29 = vld [vmem:[%s1 + $0x78] sm:$0xff]
  %s30 = scalar_lea.vmem %s1, 128
  %v31 = vld [vmem:[%s30] sm:$0xff]
  %v32 = vld [vmem:[%s30 + $0x8] sm:$0xff]
  %v33 = vld [vmem:[%s30 + $0x10] sm:$0xff]
  %v34 = vld [vmem:[%s30 + $0x18] sm:$0xff]
  %v35 = vld [vmem:[%s30 + $0x20] sm:$0xff]
  %v36 = vld [vmem:[%s30 + $0x28] sm:$0xff]
  %v37 = vld [vmem:[%s30 + $0x30] sm:$0xff]
  %v38 = vld [vmem:[%s30 + $0x38] sm:$0xff]
  %v39 = vld [vmem:[%s30 + $0x40] sm:$0xff]
  %v40 = vld [vmem:[%s30 + $0x48] sm:$0xff]
  %v41 = vld [vmem:[%s30 + $0x50] sm:$0xff]
  %v42 = vld [vmem:[%s30 + $0x58] sm:$0xff]
  %v43 = vld [vmem:[%s30 + $0x60] sm:$0xff]
  %v44 = vld [vmem:[%s30 + $0x68] sm:$0xff]
  %v45 = vld [vmem:[%s30 + $0x70] sm:$0xff]
  %v46 = vld [vmem:[%s30 + $0x78] sm:$0xff]
  %s47 = scalar_lea.vmem %s1, 256
  %v48 = vld [vmem:[%s47] sm:$0xff]
  %v49 = vld [vmem:[%s47 + $0x8] sm:$0xff]
  %v50 = vld [vmem:[%s47 + $0x10] sm:$0xff]
  %v51 = vld [vmem:[%s47 + $0x18] sm:$0xff]
  %v52 = vld [vmem:[%s47 + $0x20] sm:$0xff]
  %v53 = vld [vmem:[%s47 + $0x28] sm:$0xff]
  %v54 = vld [vmem:[%s47 + $0x30] sm:$0xff]
  %v55 = vld [vmem:[%s47 + $0x38] sm:$0xff]
  %v56 = vld [vmem:[%s47 + $0x40] sm:$0xff]
  %v57 = vld [vmem:[%s47 + $0x48] sm:$0xff]
  %v58 = vld [vmem:[%s47 + $0x50] sm:$0xff]
  %v59 = vld [vmem:[%s47 + $0x58] sm:$0xff]
  %v60 = vld [vmem:[%s47 + $0x60] sm:$0xff]
  %v61 = vld [vmem:[%s47 + $0x68] sm:$0xff]
  %v62 = vld [vmem:[%s47 + $0x70] sm:$0xff]
  %v63 = vld [vmem:[%s47 + $0x78] sm:$0xff]
  %v64 = vmul.f32 %v31, %v48
  %v65 = vmul.f32 %v32, %v49
  %v66 = vmul.f32 %v33, %v50
  %v67 = vmul.f32 %v34, %v51
  %v68 = vmul.f32 %v35, %v52
  %v69 = vmul.f32 %v36, %v53
  %v70 = vmul.f32 %v37, %v54
  %v71 = vmul.f32 %v38, %v55
  %v72 = vmul.f32 %v39, %v56
  %v73 = vmul.f32 %v40, %v57
  %v74 = vmul.f32 %v41, %v58
  %v75 = vmul.f32 %v42, %v59
  %v76 = vmul.f32 %v43, %v60
  %v77 = vmul.f32 %v44, %v61
  %v78 = vmul.f32 %v45, %v62
  %v79 = vmul.f32 %v46, %v63
  %v80 = vadd.f32 %v14, %v64
  %v81 = vadd.f32 %v15, %v65
  %v82 = vadd.f32 %v16, %v66
  %v83 = vadd.f32 %v17, %v67
  %v84 = vadd.f32 %v18, %v68
  %v85 = vadd.f32 %v19, %v69
  %v86 = vadd.f32 %v20, %v70
  %v87 = vadd.f32 %v21, %v71
  %v88 = vadd.f32 %v22, %v72
  %v89 = vadd.f32 %v23, %v73
  %v90 = vadd.f32 %v24, %v74
  %v91 = vadd.f32 %v25, %v75
  %v92 = vadd.f32 %v26, %v76
  %v93 = vadd.f32 %v27, %v77
  %v94 = vadd.f32 %v28, %v78
  %v95 = vadd.f32 %v29, %v79
  %v96 = vld [vmem:[%s2] sm:$0xff]
  %s97 = scalar_lea.vmem %s2, 8
  %v98 = vld [vmem:[%s97] sm:$0xff]
  %s99 = scalar_lea.vmem %s2, 16
  %v100 = vld [vmem:[%s99] sm:$0xff]
  %v101 = vmul.f32 %v98, %v100
  %v102 = vadd.f32 %v96, %v101
  %v103 = vld [vmem:[%s0] sm:$0xff]
  %105 = vset.pattern.permute.xlu0 0
  %106 = vperm.xlu0 %105, %v80
  %v107 = vpop.permute.xlu0 %106
  %110 = vset.pattern.permute.xlu0 0
  %111 = vperm.xlu0 %110, %v81
  %v112 = vpop.permute.xlu0 %111
  %115 = vset.pattern.permute.xlu0 0
  %116 = vperm.xlu0 %115, %v82
  %v117 = vpop.permute.xlu0 %116
  %120 = vset.pattern.permute.xlu0 0
  %121 = vperm.xlu0 %120, %v83
  %v122 = vpop.permute.xlu0 %121
  %125 = vset.pattern.permute.xlu0 0
  %126 = vperm.xlu0 %125, %v84
  %v127 = vpop.permute.xlu0 %126
  %130 = vset.pattern.permute.xlu0 0
  %131 = vperm.xlu0 %130, %v85
  %v132 = vpop.permute.xlu0 %131
  %135 = vset.pattern.permute.xlu0 0
  %136 = vperm.xlu0 %135, %v86
  %v137 = vpop.permute.xlu0 %136
  %140 = vset.pattern.permute.xlu0 0
  %141 = vperm.xlu0 %140, %v87
  %v142 = vpop.permute.xlu0 %141
  %145 = vset.pattern.permute.xlu0 0
  %146 = vperm.xlu0 %145, %v88
  %v147 = vpop.permute.xlu0 %146
  %150 = vset.pattern.permute.xlu0 0
  %151 = vperm.xlu0 %150, %v89
  %v152 = vpop.permute.xlu0 %151
  %155 = vset.pattern.permute.xlu0 0
  %156 = vperm.xlu0 %155, %v90
  %v157 = vpop.permute.xlu0 %156
  %160 = vset.pattern.permute.xlu0 0
  %161 = vperm.xlu0 %160, %v91
  %v162 = vpop.permute.xlu0 %161
  %165 = vset.pattern.permute.xlu0 0
  %166 = vperm.xlu0 %165, %v92
  %v167 = vpop.permute.xlu0 %166
  %170 = vset.pattern.permute.xlu0 0
  %171 = vperm.xlu0 %170, %v93
  %v172 = vpop.permute.xlu0 %171
  %175 = vset.pattern.permute.xlu0 0
  %176 = vperm.xlu0 %175, %v94
  %v177 = vpop.permute.xlu0 %176
  %180 = vset.pattern.permute.xlu0 0
  %181 = vperm.xlu0 %180, %v95
  %v182 = vpop.permute.xlu0 %181
  %v184 = vlaneseq
  %v185 = vshrl.u32 %v184, 7
  %v186 = vsub.s32 0, %v185
  %v187 = vrot.slane %v103, %v186
  %v188 = vmul.f32 %v107, %v187
  %v189 = vmul.f32 %v112, %v187
  %v190 = vmul.f32 %v117, %v187
  %v191 = vmul.f32 %v122, %v187
  %v192 = vmul.f32 %v127, %v187
  %v193 = vmul.f32 %v132, %v187
  %v194 = vmul.f32 %v137, %v187
  %v195 = vmul.f32 %v142, %v187
  %v196 = vmul.f32 %v147, %v187
  %v197 = vmul.f32 %v152, %v187
  %v198 = vmul.f32 %v157, %v187
  %v199 = vmul.f32 %v162, %v187
  %v200 = vmul.f32 %v167, %v187
  %v201 = vmul.f32 %v172, %v187
  %v202 = vmul.f32 %v177, %v187
  %v203 = vmul.f32 %v182, %v187
  %204 = vset.pattern.permute.xlu0 1
  %205 = vperm.xlu0 %204, %v80
  %v206 = vpop.permute.xlu0 %205
  %208 = vset.pattern.permute.xlu0 1
  %209 = vperm.xlu0 %208, %v81
  %v210 = vpop.permute.xlu0 %209
  %212 = vset.pattern.permute.xlu0 1
  %213 = vperm.xlu0 %212, %v82
  %v214 = vpop.permute.xlu0 %213
  %216 = vset.pattern.permute.xlu0 1
  %217 = vperm.xlu0 %216, %v83
  %v218 = vpop.permute.xlu0 %217
  %220 = vset.pattern.permute.xlu0 1
  %221 = vperm.xlu0 %220, %v84
  %v222 = vpop.permute.xlu0 %221
  %224 = vset.pattern.permute.xlu0 1
  %225 = vperm.xlu0 %224, %v85
  %v226 = vpop.permute.xlu0 %225
  %228 = vset.pattern.permute.xlu0 1
  %229 = vperm.xlu0 %228, %v86
  %v230 = vpop.permute.xlu0 %229
  %232 = vset.pattern.permute.xlu0 1
  %233 = vperm.xlu0 %232, %v87
  %v234 = vpop.permute.xlu0 %233
  %236 = vset.pattern.permute.xlu0 1
  %237 = vperm.xlu0 %236, %v88
  %v238 = vpop.permute.xlu0 %237
  %240 = vset.pattern.permute.xlu0 1
  %241 = vperm.xlu0 %240, %v89
  %v242 = vpop.permute.xlu0 %241
  %244 = vset.pattern.permute.xlu0 1
  %245 = vperm.xlu0 %244, %v90
  %v246 = vpop.permute.xlu0 %245
  %248 = vset.pattern.permute.xlu0 1
  %249 = vperm.xlu0 %248, %v91
  %v250 = vpop.permute.xlu0 %249
  %252 = vset.pattern.permute.xlu0 1
  %253 = vperm.xlu0 %252, %v92
  %v254 = vpop.permute.xlu0 %253
  %256 = vset.pattern.permute.xlu0 1
  %257 = vperm.xlu0 %256, %v93
  %v258 = vpop.permute.xlu0 %257
  %260 = vset.pattern.permute.xlu0 1
  %261 = vperm.xlu0 %260, %v94
  %v262 = vpop.permute.xlu0 %261
  %264 = vset.pattern.permute.xlu0 1
  %265 = vperm.xlu0 %264, %v95
  %v266 = vpop.permute.xlu0 %265
  %v268 = vlaneseq
  %v269 = vshrl.u32 %v268, 7
  %v270 = vsub.s32 1, %v269
  %v271 = vrot.slane %v103, %v270
  %v272 = vmul.f32 %v206, %v271
  %v273 = vmul.f32 %v210, %v271
  %v274 = vmul.f32 %v214, %v271
  %v275 = vmul.f32 %v218, %v271
  %v276 = vmul.f32 %v222, %v271
  %v277 = vmul.f32 %v226, %v271
  %v278 = vmul.f32 %v230, %v271
  %v279 = vmul.f32 %v234, %v271
  %v280 = vmul.f32 %v238, %v271
  %v281 = vmul.f32 %v242, %v271
  %v282 = vmul.f32 %v246, %v271
  %v283 = vmul.f32 %v250, %v271
  %v284 = vmul.f32 %v254, %v271
  %v285 = vmul.f32 %v258, %v271
  %v286 = vmul.f32 %v262, %v271
  %v287 = vmul.f32 %v266, %v271
  %v288 = vadd.f32 %v188, %v272
  %v289 = vadd.f32 %v189, %v273
  %v290 = vadd.f32 %v190, %v274
  %v291 = vadd.f32 %v191, %v275
  %v292 = vadd.f32 %v192, %v276
  %v293 = vadd.f32 %v193, %v277
  %v294 = vadd.f32 %v194, %v278
  %v295 = vadd.f32 %v195, %v279
  %v296 = vadd.f32 %v196, %v280
  %v297 = vadd.f32 %v197, %v281
  %v298 = vadd.f32 %v198, %v282
  %v299 = vadd.f32 %v199, %v283
  %v300 = vadd.f32 %v200, %v284
  %v301 = vadd.f32 %v201, %v285
  %v302 = vadd.f32 %v202, %v286
  %v303 = vadd.f32 %v203, %v287
  %304 = vset.pattern.permute.xlu0 2
  %305 = vperm.xlu0 %304, %v80
  %v306 = vpop.permute.xlu0 %305
  %308 = vset.pattern.permute.xlu0 2
  %309 = vperm.xlu0 %308, %v81
  %v310 = vpop.permute.xlu0 %309
  %312 = vset.pattern.permute.xlu0 2
  %313 = vperm.xlu0 %312, %v82
  %v314 = vpop.permute.xlu0 %313
  %316 = vset.pattern.permute.xlu0 2
  %317 = vperm.xlu0 %316, %v83
  %v318 = vpop.permute.xlu0 %317
  %320 = vset.pattern.permute.xlu0 2
  %321 = vperm.xlu0 %320, %v84
  %v322 = vpop.permute.xlu0 %321
  %324 = vset.pattern.permute.xlu0 2
  %325 = vperm.xlu0 %324, %v85
  %v326 = vpop.permute.xlu0 %325
  %328 = vset.pattern.permute.xlu0 2
  %329 = vperm.xlu0 %328, %v86
  %v330 = vpop.permute.xlu0 %329
  %332 = vset.pattern.permute.xlu0 2
  %333 = vperm.xlu0 %332, %v87
  %v334 = vpop.permute.xlu0 %333
  %336 = vset.pattern.permute.xlu0 2
  %337 = vperm.xlu0 %336, %v88
  %v338 = vpop.permute.xlu0 %337
  %340 = vset.pattern.permute.xlu0 2
  %341 = vperm.xlu0 %340, %v89
  %v342 = vpop.permute.xlu0 %341
  %344 = vset.pattern.permute.xlu0 2
  %345 = vperm.xlu0 %344, %v90
  %v346 = vpop.permute.xlu0 %345
  %348 = vset.pattern.permute.xlu0 2
  %349 = vperm.xlu0 %348, %v91
  %v350 = vpop.permute.xlu0 %349
  %352 = vset.pattern.permute.xlu0 2
  %353 = vperm.xlu0 %352, %v92
  %v354 = vpop.permute.xlu0 %353
  %356 = vset.pattern.permute.xlu0 2
  %357 = vperm.xlu0 %356, %v93
  %v358 = vpop.permute.xlu0 %357
  %360 = vset.pattern.permute.xlu0 2
  %361 = vperm.xlu0 %360, %v94
  %v362 = vpop.permute.xlu0 %361
  %364 = vset.pattern.permute.xlu0 2
  %365 = vperm.xlu0 %364, %v95
  %v366 = vpop.permute.xlu0 %365
  %v368 = vlaneseq
  %v369 = vshrl.u32 %v368, 7
  %v370 = vsub.s32 2, %v369
  %v371 = vrot.slane %v103, %v370
  %v372 = vmul.f32 %v306, %v371
  %v373 = vmul.f32 %v310, %v371
  %v374 = vmul.f32 %v314, %v371
  %v375 = vmul.f32 %v318, %v371
  %v376 = vmul.f32 %v322, %v371
  %v377 = vmul.f32 %v326, %v371
  %v378 = vmul.f32 %v330, %v371
  %v379 = vmul.f32 %v334, %v371
  %v380 = vmul.f32 %v338, %v371
  %v381 = vmul.f32 %v342, %v371
  %v382 = vmul.f32 %v346, %v371
  %v383 = vmul.f32 %v350, %v371
  %v384 = vmul.f32 %v354, %v371
  %v385 = vmul.f32 %v358, %v371
  %v386 = vmul.f32 %v362, %v371
  %v387 = vmul.f32 %v366, %v371
  %v388 = vadd.f32 %v288, %v372
  %v389 = vadd.f32 %v289, %v373
  %v390 = vadd.f32 %v290, %v374
  %v391 = vadd.f32 %v291, %v375
  %v392 = vadd.f32 %v292, %v376
  %v393 = vadd.f32 %v293, %v377
  %v394 = vadd.f32 %v294, %v378
  %v395 = vadd.f32 %v295, %v379
  %v396 = vadd.f32 %v296, %v380
  %v397 = vadd.f32 %v297, %v381
  %v398 = vadd.f32 %v298, %v382
  %v399 = vadd.f32 %v299, %v383
  %v400 = vadd.f32 %v300, %v384
  %v401 = vadd.f32 %v301, %v385
  %v402 = vadd.f32 %v302, %v386
  %v403 = vadd.f32 %v303, %v387
  %404 = vset.pattern.permute.xlu0 3
  %405 = vperm.xlu0 %404, %v80
  %v406 = vpop.permute.xlu0 %405
  %408 = vset.pattern.permute.xlu0 3
  %409 = vperm.xlu0 %408, %v81
  %v410 = vpop.permute.xlu0 %409
  %412 = vset.pattern.permute.xlu0 3
  %413 = vperm.xlu0 %412, %v82
  %v414 = vpop.permute.xlu0 %413
  %416 = vset.pattern.permute.xlu0 3
  %417 = vperm.xlu0 %416, %v83
  %v418 = vpop.permute.xlu0 %417
  %420 = vset.pattern.permute.xlu0 3
  %421 = vperm.xlu0 %420, %v84
  %v422 = vpop.permute.xlu0 %421
  %424 = vset.pattern.permute.xlu0 3
  %425 = vperm.xlu0 %424, %v85
  %v426 = vpop.permute.xlu0 %425
  %428 = vset.pattern.permute.xlu0 3
  %429 = vperm.xlu0 %428, %v86
  %v430 = vpop.permute.xlu0 %429
  %432 = vset.pattern.permute.xlu0 3
  %433 = vperm.xlu0 %432, %v87
  %v434 = vpop.permute.xlu0 %433
  %436 = vset.pattern.permute.xlu0 3
  %437 = vperm.xlu0 %436, %v88
  %v438 = vpop.permute.xlu0 %437
  %440 = vset.pattern.permute.xlu0 3
  %441 = vperm.xlu0 %440, %v89
  %v442 = vpop.permute.xlu0 %441
  %444 = vset.pattern.permute.xlu0 3
  %445 = vperm.xlu0 %444, %v90
  %v446 = vpop.permute.xlu0 %445
  %448 = vset.pattern.permute.xlu0 3
  %449 = vperm.xlu0 %448, %v91
  %v450 = vpop.permute.xlu0 %449
  %452 = vset.pattern.permute.xlu0 3
  %453 = vperm.xlu0 %452, %v92
  %v454 = vpop.permute.xlu0 %453
  %456 = vset.pattern.permute.xlu0 3
  %457 = vperm.xlu0 %456, %v93
  %v458 = vpop.permute.xlu0 %457
  %460 = vset.pattern.permute.xlu0 3
  %461 = vperm.xlu0 %460, %v94
  %v462 = vpop.permute.xlu0 %461
  %464 = vset.pattern.permute.xlu0 3
  %465 = vperm.xlu0 %464, %v95
  %v466 = vpop.permute.xlu0 %465
  %v468 = vlaneseq
  %v469 = vshrl.u32 %v468, 7
  %v470 = vsub.s32 3, %v469
  %v471 = vrot.slane %v103, %v470
  %v472 = vmul.f32 %v406, %v471
  %v473 = vmul.f32 %v410, %v471
  %v474 = vmul.f32 %v414, %v471
  %v475 = vmul.f32 %v418, %v471
  %v476 = vmul.f32 %v422, %v471
  %v477 = vmul.f32 %v426, %v471
  %v478 = vmul.f32 %v430, %v471
  %v479 = vmul.f32 %v434, %v471
  %v480 = vmul.f32 %v438, %v471
  %v481 = vmul.f32 %v442, %v471
  %v482 = vmul.f32 %v446, %v471
  %v483 = vmul.f32 %v450, %v471
  %v484 = vmul.f32 %v454, %v471
  %v485 = vmul.f32 %v458, %v471
  %v486 = vmul.f32 %v462, %v471
  %v487 = vmul.f32 %v466, %v471
  %v488 = vadd.f32 %v388, %v472
  %v489 = vadd.f32 %v389, %v473
  %v490 = vadd.f32 %v390, %v474
  %v491 = vadd.f32 %v391, %v475
  %v492 = vadd.f32 %v392, %v476
  %v493 = vadd.f32 %v393, %v477
  %v494 = vadd.f32 %v394, %v478
  %v495 = vadd.f32 %v395, %v479
  %v496 = vadd.f32 %v396, %v480
  %v497 = vadd.f32 %v397, %v481
  %v498 = vadd.f32 %v398, %v482
  %v499 = vadd.f32 %v399, %v483
  %v500 = vadd.f32 %v400, %v484
  %v501 = vadd.f32 %v401, %v485
  %v502 = vadd.f32 %v402, %v486
  %v503 = vadd.f32 %v403, %v487
  %504 = vset.pattern.permute.xlu0 4
  %505 = vperm.xlu0 %504, %v80
  %v506 = vpop.permute.xlu0 %505
  %508 = vset.pattern.permute.xlu0 4
  %509 = vperm.xlu0 %508, %v81
  %v510 = vpop.permute.xlu0 %509
  %512 = vset.pattern.permute.xlu0 4
  %513 = vperm.xlu0 %512, %v82
  %v514 = vpop.permute.xlu0 %513
  %516 = vset.pattern.permute.xlu0 4
  %517 = vperm.xlu0 %516, %v83
  %v518 = vpop.permute.xlu0 %517
  %520 = vset.pattern.permute.xlu0 4
  %521 = vperm.xlu0 %520, %v84
  %v522 = vpop.permute.xlu0 %521
  %524 = vset.pattern.permute.xlu0 4
  %525 = vperm.xlu0 %524, %v85
  %v526 = vpop.permute.xlu0 %525
  %528 = vset.pattern.permute.xlu0 4
  %529 = vperm.xlu0 %528, %v86
  %v530 = vpop.permute.xlu0 %529
  %532 = vset.pattern.permute.xlu0 4
  %533 = vperm.xlu0 %532, %v87
  %v534 = vpop.permute.xlu0 %533
  %536 = vset.pattern.permute.xlu0 4
  %537 = vperm.xlu0 %536, %v88
  %v538 = vpop.permute.xlu0 %537
  %540 = vset.pattern.permute.xlu0 4
  %541 = vperm.xlu0 %540, %v89
  %v542 = vpop.permute.xlu0 %541
  %544 = vset.pattern.permute.xlu0 4
  %545 = vperm.xlu0 %544, %v90
  %v546 = vpop.permute.xlu0 %545
  %548 = vset.pattern.permute.xlu0 4
  %549 = vperm.xlu0 %548, %v91
  %v550 = vpop.permute.xlu0 %549
  %552 = vset.pattern.permute.xlu0 4
  %553 = vperm.xlu0 %552, %v92
  %v554 = vpop.permute.xlu0 %553
  %556 = vset.pattern.permute.xlu0 4
  %557 = vperm.xlu0 %556, %v93
  %v558 = vpop.permute.xlu0 %557
  %560 = vset.pattern.permute.xlu0 4
  %561 = vperm.xlu0 %560, %v94
  %v562 = vpop.permute.xlu0 %561
  %564 = vset.pattern.permute.xlu0 4
  %565 = vperm.xlu0 %564, %v95
  %v566 = vpop.permute.xlu0 %565
  %v568 = vlaneseq
  %v569 = vshrl.u32 %v568, 7
  %v570 = vsub.s32 4, %v569
  %v571 = vrot.slane %v103, %v570
  %v572 = vmul.f32 %v506, %v571
  %v573 = vmul.f32 %v510, %v571
  %v574 = vmul.f32 %v514, %v571
  %v575 = vmul.f32 %v518, %v571
  %v576 = vmul.f32 %v522, %v571
  %v577 = vmul.f32 %v526, %v571
  %v578 = vmul.f32 %v530, %v571
  %v579 = vmul.f32 %v534, %v571
  %v580 = vmul.f32 %v538, %v571
  %v581 = vmul.f32 %v542, %v571
  %v582 = vmul.f32 %v546, %v571
  %v583 = vmul.f32 %v550, %v571
  %v584 = vmul.f32 %v554, %v571
  %v585 = vmul.f32 %v558, %v571
  %v586 = vmul.f32 %v562, %v571
  %v587 = vmul.f32 %v566, %v571
  %v588 = vadd.f32 %v488, %v572
  %v589 = vadd.f32 %v489, %v573
  %v590 = vadd.f32 %v490, %v574
  %v591 = vadd.f32 %v491, %v575
  %v592 = vadd.f32 %v492, %v576
  %v593 = vadd.f32 %v493, %v577
  %v594 = vadd.f32 %v494, %v578
  %v595 = vadd.f32 %v495, %v579
  %v596 = vadd.f32 %v496, %v580
  %v597 = vadd.f32 %v497, %v581
  %v598 = vadd.f32 %v498, %v582
  %v599 = vadd.f32 %v499, %v583
  %v600 = vadd.f32 %v500, %v584
  %v601 = vadd.f32 %v501, %v585
  %v602 = vadd.f32 %v502, %v586
  %v603 = vadd.f32 %v503, %v587
  %v604 = vmax.f32 %v588, 0.0
  %v605 = vmax.f32 %v589, 0.0
  %v606 = vmax.f32 %v590, 0.0
  %v607 = vmax.f32 %v591, 0.0
  %v608 = vmax.f32 %v592, 0.0
  %v609 = vmax.f32 %v593, 0.0
  %v610 = vmax.f32 %v594, 0.0
  %v611 = vmax.f32 %v595, 0.0
  %v612 = vmax.f32 %v596, 0.0
  %v613 = vmax.f32 %v597, 0.0
  %v614 = vmax.f32 %v598, 0.0
  %v615 = vmax.f32 %v599, 0.0
  %v616 = vmax.f32 %v600, 0.0
  %v617 = vmax.f32 %v601, 0.0
  %v618 = vmax.f32 %v602, 0.0
  %v619 = vmax.f32 %v603, 0.0
  %620 = vmatprep.subr.mxu0 0.0
  %621 = vmatpush1.msra.mxu0 %v619
  %622 = vmatprep.subr.mxu0 0.0
  %623 = vmatpush1.msra.mxu0 %v618
  %624 = vmatprep.subr.mxu0 0.0
  %625 = vmatpush1.msra.mxu0 %v617
  %626 = vmatprep.subr.mxu0 0.0
  %627 = vmatpush1.msra.mxu0 %v616
  %628 = vmatprep.subr.mxu0 0.0
  %629 = vmatpush1.msra.mxu0 %v615
  %630 = vmatprep.subr.mxu0 0.0
  %631 = vmatpush1.msra.mxu0 %v614
  %632 = vmatprep.subr.mxu0 0.0
  %633 = vmatpush1.msra.mxu0 %v613
  %634 = vmatprep.subr.mxu0 0.0
  %635 = vmatpush1.msra.mxu0 %v612
  %636 = vmatprep.subr.mxu0 0.0
  %637 = vmatpush1.msra.mxu0 %v611
  %638 = vmatprep.subr.mxu0 0.0
  %639 = vmatpush1.msra.mxu0 %v610
  %640 = vmatprep.subr.mxu0 0.0
  %641 = vmatpush1.msra.mxu0 %v609
  %642 = vmatprep.subr.mxu0 0.0
  %643 = vmatpush1.msra.mxu0 %v608
  %644 = vmatprep.subr.mxu0 0.0
  %645 = vmatpush1.msra.mxu0 %v607
  %646 = vmatprep.subr.mxu0 0.0
  %647 = vmatpush1.msra.mxu0 %v606
  %648 = vmatprep.subr.mxu0 0.0
  %649 = vmatpush1.msra.mxu0 %v605
  %650 = vmatprep.subr.mxu0 0.0
  %651 = vmatpush1.msra.mxu0 %v604
  %652 = vmatprep.subr.mxu0 0.0
  %653 = vmatpush2.msra.mxu0 0.0
  %654 = vmatprep.subr.mxu0 0.0
  %655 = vmatpush2.msra.mxu0 0.0
  %656 = vmatprep.subr.mxu0 0.0
  %657 = vmatpush2.msra.mxu0 0.0
  %658 = vmatprep.subr.mxu0 0.0
  %659 = vmatpush2.msra.mxu0 0.0
  %660 = vmatprep.subr.mxu0 0.0
  %661 = vmatpush2.msra.mxu0 0.0
  %662 = vmatprep.subr.mxu0 0.0
  %663 = vmatpush2.msra.mxu0 0.0
  %664 = vmatprep.subr.mxu0 0.0
  %665 = vmatpush2.msra.mxu0 0.0
  %666 = vmatprep.subr.mxu0 0.0
  %667 = vmatpush2.msra.mxu0 0.0
  %668 = vmatprep.subr.mxu0 0.0
  %669 = vmatpush2.msra.mxu0 0.0
  %670 = vmatprep.subr.mxu0 0.0
  %671 = vmatpush2.msra.mxu0 0.0
  %672 = vmatprep.subr.mxu0 0.0
  %673 = vmatpush2.msra.mxu0 0.0
  %674 = vmatprep.subr.mxu0 0.0
  %675 = vmatpush2.msra.mxu0 0.0
  %676 = vmatprep.subr.mxu0 0.0
  %677 = vmatpush2.msra.mxu0 0.0
  %678 = vmatprep.subr.mxu0 0.0
  %679 = vmatpush2.msra.mxu0 0.0
  %680 = vmatprep.subr.mxu0 0.0
  %681 = vmatpush2.msra.mxu0 0.0
  %682 = vmatprep.subr.mxu0 0.0
  %683 = vmatpush2.msra.mxu0 0.0
  %684 = vmatprep.mubr.f32.mxu0 0.0
  %685 = vmatmul.mubr.f32.gmra.mxu0 %v102
  %v686 = vpop.f32.mrf.mxu0
  %v687 = vadd.f32 0.0, %v686
  %v688 = vpop.f32.mrf.mxu0
  %689 = vdwg.mxu0
  %690 = vst [vmem:[%s3] sm:$0xff] %v687
  // Predicated region
  $region14: #{bayesian_net_forward.1} parent=0 // pred_check
    _
  $region15: #{bayesian_net_forward.1} parent=0 // pred_check_branch
    %692 = sbr.rel (0) target = $region17
  $region16: #{bayesian_net_forward.1} parent=0 // pred_region
    _
  $region17: #{bayesian_net_forward.1} parent=0 // pred_fallthru
    _
  // Predicated region
  $region18: #{bayesian_net_forward.1} parent=0 // pred_check
    _
  $region19: #{bayesian_net_forward.1} parent=0 // pred_check_branch
    %694 = sbr.rel (0) target = $region21
  $region20: #{bayesian_net_forward.1} parent=0 // pred_region
    _
  $region21: #{bayesian_net_forward.1} parent=0 // pred_fallthru
    _

</llo_original>
